<compile_context>
chip_gen: v5e
topology: v5e:2x2
jax: 0.10.0
libtpu: 0.0.40
codegen_flags: <defaults>
</compile_context>

<pallas_src>
import jax
import jax.numpy as jnp
from jax.experimental import pallas as pl
from jax.experimental.pallas import tpu as pltpu

EPS = 1e-5
LANES = 512  # multiple of 256: full lanes, each row holds whole (a, b) pairs


def _sublane_multiple(dtype) -> int:
    # Minimum sublane tile: f32 -> 8, bf16/f16 -> 16, int8/fp8 -> 32.
    return {4: 8, 2: 16, 1: 32}.get(jnp.dtype(dtype).itemsize, 8)


def layernorm2_kernel(x_ref, w_ref, b_ref, o_ref):
    # x_ref / o_ref : (br, LANES) lane-dense tile; even lanes hold a_k, odd hold b_k.
    # w_ref / b_ref : (1, LANES) rows [w0,w1,w0,w1,...] / [b0,b1,b0,b1,...] (f32).
    x = x_ref[...].astype(jnp.float32)

    # Pair partner of each lane: even lane k pairs with k+1, odd lane k with k-1.
    nxt = jnp.roll(x, -1, axis=1)  # nxt[..., i] = x[..., i+1]  (wrap at i=L-1, never used)
    prv = jnp.roll(x, 1, axis=1)   # prv[..., i] = x[..., i-1]  (wrap at i=0,   never used)
    parity = jax.lax.broadcasted_iota(jnp.int32, x.shape, dimension=1) & 1
    is_even = parity == 0
    d = x - jnp.where(is_even, nxt, prv)          # +-(a - b), sign matches position

    # Closed-form LayerNorm over a pair: (d/2) * rsqrt((d/2)^2 + eps) == d * rsqrt(d^2 + 4 eps)
    inv = jax.lax.rsqrt(d * d + 4.0 * EPS)
    o_ref[...] = (d * inv * w_ref[...] + b_ref[...]).astype(o_ref.dtype)


def layernorm2_pallas(x, weight, bias, *, block_rows=2048):
    """LayerNorm over the last axis (size 2) with elementwise affine (PyTorch semantics)."""
    orig_shape = x.shape
    assert orig_shape[-1] == 2, "module defines LayerNorm(2): last dim must be 2"
    assert weight.shape[-1] == 2 and bias.shape[-1] == 2
    dtype = x.dtype

    n_elems = int(x.size)            # even, since last dim == 2
    flat = x.reshape(-1)

    rows = n_elems // LANES          # full lane-dense rows
    n_main = rows * LANES
    tail = n_elems - n_main          # < LANES, even

    w32 = weight.reshape(-1).astype(jnp.float32)
    b32 = bias.reshape(-1).astype(jnp.float32)

    pieces = []

    if rows > 0:
        x2d = flat[:n_main].reshape(rows, LANES)

        sub = _sublane_multiple(dtype)
        br = max(sub, (block_rows // sub) * sub)
        if br >= rows:
            br = rows                # single full-extent block (always legal)
        grid = (pl.cdiv(rows, br),)  # last block may be partial; Pallas masks it

        # gamma/beta broadcast along lanes once on the host (4 scalars -> 2 x 2 KiB rows).
        w_row = jnp.tile(w32.reshape(1, 2), (1, LANES // 2))   # (1, LANES)
        b_row = jnp.tile(b32.reshape(1, 2), (1, LANES // 2))   # (1, LANES)

        itemsize = jnp.dtype(dtype).itemsize
        cost = pl.CostEstimate(
            flops=10 * n_main,
            transcendentals=n_main,
            bytes_accessed=2 * n_main * itemsize + 2 * LANES * 4,
        )

        out_main = pl.pallas_call(
            layernorm2_kernel,
            out_shape=jax.ShapeDtypeStruct((rows, LANES), dtype),
            grid=grid,
            in_specs=[
                pl.BlockSpec((br, LANES), lambda i: (i, 0)),
                pl.BlockSpec((1, LANES), lambda i: (0, 0)),
                pl.BlockSpec((1, LANES), lambda i: (0, 0)),
            ],
            out_specs=pl.BlockSpec((br, LANES), lambda i: (i, 0)),
            compiler_params=pltpu.CompilerParams(
                dimension_semantics=("parallel",),      # shard row-blocks across TCs
                vmem_limit_bytes=48 * 1024 * 1024,      # headroom under v7x's 64 MiB
            ),
            cost_estimate=cost,
        )(x2d, w_row, b_row)
        pieces.append(out_main.reshape(-1))

    if tail > 0:
        # Tiny (<512 elem) epilogue in plain JAX; avoids whole-tensor pad/slice copies.
        xt = flat[n_main:].astype(jnp.float32).reshape(-1, 2)
        d = xt[:, 0:1] - xt[:, 1:2]
        inv = jax.lax.rsqrt(d * d + 4.0 * EPS)
        out_t = jnp.concatenate([d * inv, -d * inv], axis=1) * w32.reshape(1, 2) + b32.reshape(1, 2)
        pieces.append(out_t.astype(dtype).reshape(-1))

    out_flat = pieces[0] if len(pieces) == 1 else jnp.concatenate(pieces)
    return out_flat.reshape(orig_shape)


def layernorm2_ref(x, weight, bias):
    x = x.astype(jnp.float32)
    mean = jnp.mean(x, axis=-1, keepdims=True)
    var = jnp.mean((x - mean) ** 2, axis=-1, keepdims=True)
    return (x - mean) * jax.lax.rsqrt(var + EPS) * weight.astype(jnp.float32) + bias.astype(jnp.float32)


if __name__ == "__main__":
    key = jax.random.PRNGKey(0)
    kx1, kx2, kx3, kw, kb = jax.random.split(key, 5)

    weight = 1.0 + 0.1 * jax.random.normal(kw, (2,), dtype=jnp.float32)
    bias = 0.1 * jax.random.normal(kb, (2,), dtype=jnp.float32)

    # 1) LANES-divisible shape -> pure kernel path (2048 elems = 4 lane-rows).
    x1 = jax.random.normal(kx1, (2, 8, 64, 2), dtype=jnp.float32)
    o1 = jax.block_until_ready(layernorm2_pallas(x1, weight, bias))
    r1 = layernorm2_ref(x1, weight, bias)
    assert o1.shape == x1.shape
    assert jnp.allclose(o1, r1, atol=1e-4, rtol=1e-4), "mismatch (divisible)"

    # 2) Multi-step grid with a partial trailing block (rows=12, block_rows=8).
    x2 = jax.random.normal(kx2, (6, 8, 64, 2), dtype=jnp.float32)
    o2 = jax.block_until_ready(layernorm2_pallas(x2, weight, bias, block_rows=8))
    r2 = layernorm2_ref(x2, weight, bias)
    assert jnp.allclose(o2, r2, atol=1e-4, rtol=1e-4), "mismatch (partial block)"

    # 3) Ragged size: kernel prefix + JAX tail epilogue (2232 elems).
    x3 = jax.random.normal(kx3, (4, 9, 31, 2), dtype=jnp.float32)
    o3 = jax.block_until_ready(layernorm2_pallas(x3, weight, bias))
    r3 = layernorm2_ref(x3, weight, bias)
    assert jnp.allclose(o3, r3, atol=1e-4, rtol=1e-4), "mismatch (ragged)"

    # 4) Tiny all-ones tensor (spec-like input, last dim fixed to 2) -> epilogue-only path.
    x4 = jnp.ones((1, 2, 10, 2), dtype=jnp.float32)
    o4 = jax.block_until_ready(layernorm2_pallas(x4, weight, bias))
    r4 = layernorm2_ref(x4, weight, bias)
    assert jnp.allclose(o4, r4, atol=1e-4, rtol=1e-4), "mismatch (tiny/ones)"

    # 5) bf16 input exercises dtype-aware sublane rounding.
    x5 = x1.astype(jnp.bfloat16)
    o5 = jax.block_until_ready(layernorm2_pallas(x5, weight, bias))
    r5 = layernorm2_ref(x5, weight, bias)
    assert jnp.allclose(o5.astype(jnp.float32), r5, atol=3e-2, rtol=3e-2), "mismatch (bf16)"

    print("KERNEL_OK")
</pallas_src>

<mosaic_0001>
module attributes {stable_mosaic.version = 11 : i64} {
  func.func @layernorm2_kernel(%arg0: i32, %arg1: memref<4x512xf32, #tpu.memory_space<vmem>>, %arg2: memref<1x512xf32, #tpu.memory_space<vmem>>, %arg3: memref<1x512xf32, #tpu.memory_space<vmem>>, %arg4: memref<4x512xf32, #tpu.memory_space<vmem>>) attributes {dimension_semantics = [#tpu.dimension_semantics<parallel>], iteration_bounds = array<i64: 1>, scalar_prefetch = 0 : i64, scratch_operands = 0 : i64, tpu.core_type = #tpu.core_type<tc>, window_params = [{transform_indices = @transform_0, window_bounds = array<i64: 4, 512>}, {pipeline_mode = #tpu.pipeline_mode<synchronous>, transform_indices = @transform_1, window_bounds = array<i64: 1, 512>}, {pipeline_mode = #tpu.pipeline_mode<synchronous>, transform_indices = @transform_2, window_bounds = array<i64: 1, 512>}, {transform_indices = @transform_3, window_bounds = array<i64: 4, 512>}]} {
    %c0 = arith.constant 0 : index
    %c0_0 = arith.constant 0 : index
    %0 = vector.load %arg1[%c0, %c0_0] : memref<4x512xf32, #tpu.memory_space<vmem>>, vector<4x512xf32>
    %1 = vector.extract_strided_slice %0 {offsets = [0, 1], sizes = [4, 511], strides = [1, 1]} : vector<4x512xf32> to vector<4x511xf32>
    %2 = vector.extract_strided_slice %0 {offsets = [0, 0], sizes = [4, 1], strides = [1, 1]} : vector<4x512xf32> to vector<4x1xf32>
    %3 = tpu.concatenate %1, %2 in 1 : vector<4x511xf32>, vector<4x1xf32> -> vector<4x512xf32>
    %4 = vector.extract_strided_slice %0 {offsets = [0, 511], sizes = [4, 1], strides = [1, 1]} : vector<4x512xf32> to vector<4x1xf32>
    %5 = vector.extract_strided_slice %0 {offsets = [0, 0], sizes = [4, 511], strides = [1, 1]} : vector<4x512xf32> to vector<4x511xf32>
    %6 = tpu.concatenate %4, %5 in 1 : vector<4x1xf32>, vector<4x511xf32> -> vector<4x512xf32>
    %7 = tpu.iota {dimensions = array<i32: 1>} : vector<4x512xi32>
    %c1_i32 = arith.constant 1 : i32
    %8 = vector.broadcast %c1_i32 : i32 to vector<4x512xi32>
    %9 = arith.andi %7, %8 : vector<4x512xi32>
    %c0_i32 = arith.constant 0 : i32
    %10 = vector.broadcast %c0_i32 : i32 to vector<4x512xi32>
    %11 = arith.cmpi eq, %9, %10 : vector<4x512xi32>
    %12 = arith.select %11, %3, %6 : vector<4x512xi1>, vector<4x512xf32>
    %13 = arith.subf %0, %12 : vector<4x512xf32>
    %14 = arith.mulf %13, %13 : vector<4x512xf32>
    %cst = arith.constant 4.000000e-05 : f32
    %15 = vector.broadcast %cst : f32 to vector<4x512xf32>
    %16 = arith.addf %14, %15 : vector<4x512xf32>
    %17 = math.rsqrt %16 : vector<4x512xf32>
    %18 = arith.mulf %13, %17 : vector<4x512xf32>
    %c0_1 = arith.constant 0 : index
    %c0_2 = arith.constant 0 : index
    %19 = vector.load %arg2[%c0_1, %c0_2] : memref<1x512xf32, #tpu.memory_space<vmem>>, vector<1x512xf32>
    %20 = vector.broadcast %19 : vector<1x512xf32> to vector<4x512xf32>
    %21 = arith.mulf %18, %20 : vector<4x512xf32>
    %c0_3 = arith.constant 0 : index
    %c0_4 = arith.constant 0 : index
    %22 = vector.load %arg3[%c0_3, %c0_4] : memref<1x512xf32, #tpu.memory_space<vmem>>, vector<1x512xf32>
    %23 = vector.broadcast %22 : vector<1x512xf32> to vector<4x512xf32>
    %24 = arith.addf %21, %23 : vector<4x512xf32>
    %c0_5 = arith.constant 0 : index
    %c0_6 = arith.constant 0 : index
    %25 = vector.load %arg4[%c0_5, %c0_6] : memref<4x512xf32, #tpu.memory_space<vmem>>, vector<4x512xf32>
    tpu.vector_store %arg4[%c0_5, %c0_6], %24 {strides = array<i32>} : memref<4x512xf32, #tpu.memory_space<vmem>>, vector<4x512xf32>,
    return
  }
  func.func @transform_0(%arg0: i32) -> (i32, i32) {
    %c0_i32 = arith.constant 0 : i32
    %c0_i32_0 = arith.constant 0 : i32
    return %arg0, %c0_i32 : i32, i32
  }
  func.func @transform_1(%arg0: i32) -> (i32, i32) {
    %c0_i32 = arith.constant 0 : i32
    %c0_i32_0 = arith.constant 0 : i32
    %c0_i32_1 = arith.constant 0 : i32
    return %c0_i32, %c0_i32_0 : i32, i32
  }
  func.func @transform_2(%arg0: i32) -> (i32, i32) {
    %c0_i32 = arith.constant 0 : i32
    %c0_i32_0 = arith.constant 0 : i32
    %c0_i32_1 = arith.constant 0 : i32
    return %c0_i32, %c0_i32_0 : i32, i32
  }
  func.func @transform_3(%arg0: i32) -> (i32, i32) {
    %c0_i32 = arith.constant 0 : i32
    %c0_i32_0 = arith.constant 0 : i32
    return %arg0, %c0_i32 : i32, i32
  }
}

</mosaic_0001>

<llo_original>
// kernel: tpu_custom_call.1
$region0: #{tpu_custom_call.1}
  #allocation0 [shape = 'u32[]', space=smem, size = 0x4, offset = 0x4, fixed_abs, tag = 'smem constant byte address 0x4 - core index']
  #allocation1 [shape = 'u32[72,128]{1,0:T(1,128)}', space=vmem, size = 0x9000, scoped, tag = 'internal scratch']
  %s0 = inlined_call_operand.hbm [shape: f32[4,512], index: 0, kind: input, shape index: {}]
  %s1 = inlined_call_operand.hbm [shape: f32[1,512], index: 1, kind: input, shape index: {}]
  %s2 = inlined_call_operand.hbm [shape: f32[1,512], index: 2, kind: input, shape index: {}]
  %s3 = inlined_call_operand.hbm [shape: f32[4,512], index: 3, kind: output, shape index: {}]
  %s4 = sld [smem:[#allocation0]]
  $region34: #{tpu_custom_call.1} parent=0
    _
  %s6 = ssub.s32 1, %s4
  %s7 = scalar_select 0, %s6, %s4
  $region1: #{tpu_custom_call.1} parent=0
    #allocation2 [shape = 'u8[8192]{0}', space=vmem, size = 0x2000, scoped, tag = 'input window, operand 0, single buffered']
    #allocation3 [shape = 's32[1]{0}', space=sflag, size = 0x4, scoped, tag = 'scoped memory for tpu_custom_call.1']
    #allocation4 [shape = 's32[1]{0}', space=sflag, size = 0x4, scoped, tag = 'scoped memory for tpu_custom_call.1']
    #allocation5 [shape = 'u8[2048]{0}', space=vmem, size = 0x800, scoped, tag = 'input window, operand 1, single buffered']
    #allocation6 [shape = 's32[1]{0}', space=sflag, size = 0x4, scoped, tag = 'scoped memory for tpu_custom_call.1']
    #allocation7 [shape = 'u8[2048]{0}', space=vmem, size = 0x800, scoped, tag = 'input window, operand 2, single buffered']
    #allocation8 [shape = 'u8[8192]{0}', space=vmem, size = 0x2000, scoped, tag = 'output window, operand 0, single buffered']
    %8 = vsyncpa [#allocation3], 0
    %9 = vsyncpa [#allocation6], 0
    %10 = vsyncpa [#allocation4], 0
    // Predicated region
    $region2: #{tpu_custom_call.1} parent=1 // pred_check
      _
    $region3: #{tpu_custom_call.1} parent=1 // pred_check_branch
      %12 = sbr.rel (0) target = $region5
    $region4: #{tpu_custom_call.1} parent=1 // pred_region
      %14 = vsyncadd [#allocation3], 0
      %s16 = sshll.u32 %s0, 4
      %s17 = int_to_ptr.hbm [resolvable:$true] %s16
      %s18 = sshll.u32 [#allocation2], 4
      %s19 = int_to_ptr.vmem [resolvable:$true] %s18
      %21 = dma.hbm_to_vmem [thread:$0]  %s17, 256, %s19, [#allocation3]
    $region5: #{tpu_custom_call.1} parent=1 // pred_fallthru
      _
    // Predicated region
    $region6: #{tpu_custom_call.1} parent=1 // pred_check
      _
    $region7: #{tpu_custom_call.1} parent=1 // pred_check_branch
      %23 = sbr.rel (0) target = $region9
    $region8: #{tpu_custom_call.1} parent=1 // pred_region
      %25 = vsyncadd [#allocation6], 0
      %s27 = sshll.u32 %s1, 4
      %s28 = int_to_ptr.hbm [resolvable:$true] %s27
      %s29 = sshll.u32 [#allocation5], 4
      %s30 = int_to_ptr.vmem [resolvable:$true] %s29
      %32 = dma.hbm_to_vmem [thread:$0]  %s28, 64, %s30, [#allocation6]
    $region9: #{tpu_custom_call.1} parent=1 // pred_fallthru
      _
    // Predicated region
    $region10: #{tpu_custom_call.1} parent=1 // pred_check
      _
    $region11: #{tpu_custom_call.1} parent=1 // pred_check_branch
      %34 = sbr.rel (0) target = $region13
    $region12: #{tpu_custom_call.1} parent=1 // pred_region
      %36 = vsyncadd [#allocation6], 0
      %s38 = sshll.u32 %s2, 4
      %s39 = int_to_ptr.hbm [resolvable:$true] %s38
      %s40 = sshll.u32 [#allocation7], 4
      %s41 = int_to_ptr.vmem [resolvable:$true] %s40
      %43 = dma.hbm_to_vmem [thread:$0]  %s39, 64, %s41, [#allocation6]
    $region13: #{tpu_custom_call.1} parent=1 // pred_fallthru
      _
    // Predicated region
    $region14: #{tpu_custom_call.1} parent=1 // pred_check
      _
    $region15: #{tpu_custom_call.1} parent=1 // pred_check_branch
      %45 = sbr.rel (0) target = $region17
    $region16: #{tpu_custom_call.1} parent=1 // pred_region
      %47 = dma.done [#allocation3], 256
    $region17: #{tpu_custom_call.1} parent=1 // pred_fallthru
      _
    // Predicated region
    $region18: #{tpu_custom_call.1} parent=1 // pred_check
      _
    $region19: #{tpu_custom_call.1} parent=1 // pred_check_branch
      %49 = sbr.rel (0) target = $region21
    $region20: #{tpu_custom_call.1} parent=1 // pred_region
      %51 = dma.done [#allocation6], 64
    $region21: #{tpu_custom_call.1} parent=1 // pred_fallthru
      _
    // Predicated region
    $region22: #{tpu_custom_call.1} parent=1 // pred_check
      _
    $region23: #{tpu_custom_call.1} parent=1 // pred_check_branch
      %53 = sbr.rel (0) target = $region25
    $region24: #{tpu_custom_call.1} parent=1 // pred_region
      %55 = dma.done [#allocation6], 64
    $region25: #{tpu_custom_call.1} parent=1 // pred_fallthru
      _
    %v56 = vld [vmem:[#allocation2] sm:$0xff]
    %v57 = vld [vmem:[#allocation2 + $0x8] sm:$0xff]
    %60 = vst [vmem:[#allocation1] ss:$2 sm:$0xff] %v56
    %s61 = scalar_lea.vmem [#allocation1], 16
    %62 = vst [vmem:[%s61] ss:$2 sm:$0xff] %v57
    %v63 = vld.sshfl [vmem:[#allocation1] sm:$0xff pattern:$0x75316420]
    %v64 = vld.sshfl [vmem:[#allocation1 + $0x8] sm:$0xff pattern:$0x75316420]
    %v65 = vld.sshfl [vmem:[#allocation1 + $0x10] sm:$0xff pattern:$0x75316420]
    %v66 = vld.sshfl [vmem:[#allocation1 + $0x18] sm:$0xff pattern:$0x75316420]
    %67 = vrot.lane.b32.xlu0 %v63, 127
    %v68 = vpop.permute.xlu0 %67
    %69 = vrot.lane.b32.xlu0 %v64, 127
    %v70 = vpop.permute.xlu0 %69
    %71 = vrot.lane.b32.xlu0 %v65, 127
    %v72 = vpop.permute.xlu0 %71
    %73 = vrot.lane.b32.xlu0 %v66, 127
    %v74 = vpop.permute.xlu0 %73
    %vm75 = vcmask 1039360
    %v76 = vsel %vm75, %v68, %v70
    %v77 = vsel %vm75, %v70, %v72
    %v78 = vsel %vm75, %v72, %v74
    %83 = vst [vmem:[#allocation1] ss:$2 sm:$0xff] %v56
    %v84 = vld.sshfl [vmem:[#allocation1] sm:$0xff pattern:$0x75316420]
    %85 = vrot.lane.b32.xlu0 %v84, 127
    %v86 = vpop.permute.xlu0 %85
    %v88 = vsel %vm75, %v74, %v86
    %89 = vst [vmem:[#allocation1] ss:$2 sm:$0xff] %v57
    %v90 = vld.sshfl [vmem:[#allocation1 + $0x8] sm:$0xff pattern:$0x75316420]
    %91 = vrot.lane.b32.xlu0 %v90, 1
    %v92 = vpop.permute.xlu0 %91
    %94 = vst [vmem:[#allocation1] ss:$2 sm:$0xff] %v56
    %s95 = scalar_lea.vmem [#allocation1], 16
    %96 = vst [vmem:[%s95] ss:$2 sm:$0xff] %v57
    %v97 = vld.sshfl [vmem:[#allocation1] sm:$0xff pattern:$0x75316420]
    %v98 = vld.sshfl [vmem:[#allocation1 + $0x8] sm:$0xff pattern:$0x75316420]
    %v99 = vld.sshfl [vmem:[#allocation1 + $0x10] sm:$0xff pattern:$0x75316420]
    %v100 = vld.sshfl [vmem:[#allocation1 + $0x18] sm:$0xff pattern:$0x75316420]
    %101 = vrot.lane.b32.xlu0 %v97, 1
    %v102 = vpop.permute.xlu0 %101
    %103 = vrot.lane.b32.xlu0 %v98, 1
    %v104 = vpop.permute.xlu0 %103
    %105 = vrot.lane.b32.xlu0 %v99, 1
    %v106 = vpop.permute.xlu0 %105
    %107 = vrot.lane.b32.xlu0 %v100, 1
    %v108 = vpop.permute.xlu0 %107
    %vm109 = vcmask 7168
    %v110 = vsel %vm109, %v102, %v104
    %v111 = vsel %vm109, %v104, %v106
    %v112 = vsel %vm109, %v106, %v108
    %v117 = vsel %vm109, %v92, %v102
    %v118 = vlaneseq
    %v119 = vand.u32 %v118, 127
    %v120 = vadd.s32 %v119, 128
    %v121 = vadd.s32 %v119, 256
    %v122 = vadd.s32 %v119, 384
    %v123 = vand.u32 %v119, 1
    %v124 = vand.u32 %v120, 1
    %v125 = vand.u32 %v121, 1
    %v126 = vand.u32 %v122, 1
    %vm127 = vcmp.eq.s32.totalorder %v123, 0
    %vm128 = vcmp.eq.s32.totalorder %v124, 0
    %vm129 = vcmp.eq.s32.totalorder %v125, 0
    %vm130 = vcmp.eq.s32.totalorder %v126, 0
    %v131 = vsel %vm127, %v76, %v117
    %v132 = vsel %vm128, %v77, %v110
    %v133 = vsel %vm129, %v78, %v111
    %v134 = vsel %vm130, %v88, %v112
    %v139 = vrot.slane %v132, 4
    %v140 = vrot.slane %v134, 4
    %vm141 = vcmask 1043456
    %v142 = vsel %vm141, %v131, %v139
    %v143 = vsel %vm141, %v133, %v140
    %v146 = vsub.f32 %v56, %v142
    %v147 = vsub.f32 %v57, %v143
    %v148 = vmul.f32 %v146, %v146
    %v149 = vmul.f32 %v147, %v147
    %v150 = vadd.f32 %v148, 4e-05
    %v151 = vadd.f32 %v149, 4e-05
    %v152 = vrsqrt.pop %v150
    %v153 = vmul.f32 %v152, %v150
    %v154 = vmul.f32 %v153, %v152
    %v155 = vmul.f32 0.5, %v154
    %v156 = vsub.f32 1.5, %v155
    %v157 = vmul.f32 %v152, %v156
    %vm158 = vweird.f32 %v150
    %vm159 = vweird.f32 %v152
    %vm160 = vmor %vm158, %vm159
    %v161 = vsel %vm160, %v152, %v157
    %v162 = vrsqrt.pop %v151
    %v163 = vmul.f32 %v162, %v151
    %v164 = vmul.f32 %v163, %v162
    %v165 = vmul.f32 0.5, %v164
    %v166 = vsub.f32 1.5, %v165
    %v167 = vmul.f32 %v162, %v166
    %vm168 = vweird.f32 %v151
    %vm169 = vweird.f32 %v162
    %vm170 = vmor %vm168, %vm169
    %v171 = vsel %vm170, %v162, %v167
    %v172 = vmul.f32 %v146, %v161
    %v173 = vmul.f32 %v147, %v171
    %v174 = vld [vmem:[#allocation5] sm:$0xf]
    %v176 = vperm.slane %v174, 0
    %v177 = vperm.slane %v174, 1
    %v178 = vperm.slane %v174, 2
    %v179 = vperm.slane %v174, 3
    %v180 = vrot.slane %v177, 4
    %v181 = vrot.slane %v179, 4
    %v182 = vsel %vm141, %v176, %v180
    %v183 = vsel %vm141, %v178, %v181
    %v186 = vmul.f32 %v172, %v182
    %v187 = vmul.f32 %v173, %v183
    %v188 = vld [vmem:[#allocation7] sm:$0xf]
    %v190 = vperm.slane %v188, 0
    %v191 = vperm.slane %v188, 1
    %v192 = vperm.slane %v188, 2
    %v193 = vperm.slane %v188, 3
    %v194 = vrot.slane %v191, 4
    %v195 = vrot.slane %v193, 4
    %v196 = vsel %vm141, %v190, %v194
    %v197 = vsel %vm141, %v192, %v195
    %v200 = vadd.f32 %v186, %v196
    %v201 = vadd.f32 %v187, %v197
    %202 = vst [vmem:[#allocation8] sm:$0xff] %v200
    %203 = vst [vmem:[#allocation8 + $0x8] sm:$0xff] %v201
    // Predicated region
    $region26: #{tpu_custom_call.1} parent=1 // pred_check
      _
    $region27: #{tpu_custom_call.1} parent=1 // pred_check_branch
      %205 = sbr.rel (0) target = $region29
    $region28: #{tpu_custom_call.1} parent=1 // pred_region
      %207 = vsyncadd [#allocation4], 0
      %s209 = sshll.u32 [#allocation8], 4
      %s210 = int_to_ptr.vmem [resolvable:$true] %s209
      %s211 = sshll.u32 %s3, 4
      %s212 = int_to_ptr.hbm [resolvable:$true] %s211
      %214 = dma.vmem_to_hbm [thread:$0]  %s210, 256, %s212, [#allocation4]
    $region29: #{tpu_custom_call.1} parent=1 // pred_fallthru
      _
    // Predicated region
    $region30: #{tpu_custom_call.1} parent=1 // pred_check
      _
    $region31: #{tpu_custom_call.1} parent=1 // pred_check_branch
      %216 = sbr.rel (0) target = $region33
    $region32: #{tpu_custom_call.1} parent=1 // pred_region
      %218 = dma.done [#allocation4], 256
    $region33: #{tpu_custom_call.1} parent=1 // pred_fallthru
      _
    %219 = vsyncpa [#allocation3], 1
    %220 = vsyncpa [#allocation6], 1
    %221 = vsyncpa [#allocation4], 1

</llo_original>
